<compile_context>
chip_gen: v7x
topology: tpu7x:2x2x1
jax: 0.10.0
libtpu: 0.0.40
codegen_flags: <defaults>
</compile_context>

<pallas_src>
import functools

import jax
import jax.numpy as jnp
from jax.experimental import pallas as pl
from jax.experimental.pallas import tpu as pltpu


def _sp_attention_kernel(w_ref, x_ref, cmask_ref, o_ref, m_ref, pad_ref, *,
                         ksize, width, hw, lpad):
    """One (bn, ct, H*W) block: running channel max; on the last C step, the
    kxk shifted-add stencil + sigmoid.

    w_ref:     (k, k)             f32, SMEM  (conv weights, scalar reads)
    x_ref:     (bn, ct, H*W)      input dtype, VMEM
    cmask_ref: (k, H*W)           f32, VMEM  (column-boundary 0/1 masks)
    o_ref:     (bn, 1, H*W)       output
    m_ref:     (bn, H*W)          f32 scratch (running channel max)
    pad_ref:   (bn, 2*lpad+H*W)   f32 scratch (zero-padded flat max map)
    """
    pad = ksize // 2
    cj = pl.program_id(1)

    @pl.when(cj == 0)
    def _():
        m_ref[...] = jnp.full_like(m_ref, -jnp.inf)

    blk_max = jnp.max(x_ref[...].astype(jnp.float32), axis=1)      # (bn, H*W)
    m_ref[...] = jnp.maximum(m_ref[...], blk_max)

    @pl.when(cj == pl.num_programs(1) - 1)
    def _():
        # Zero-padded flat copy of the max map: taps that fall off the top /
        # bottom image rows read zeros from the padding; left / right column
        # overflow is killed by the precomputed column masks.
        pad_ref[...] = jnp.zeros_like(pad_ref)
        pad_ref[:, lpad:lpad + hw] = m_ref[...]

        acc = jnp.zeros(m_ref.shape, jnp.float32)
        for i in range(ksize):                      # static k^2 unroll
            for j in range(ksize):
                off = lpad + (i - pad) * width + (j - pad)   # static lane shift
                tap = pad_ref[:, off:off + hw]               # (bn, H*W)
                acc = acc + (w_ref[i, j] * cmask_ref[j:j + 1, :]) * tap

        # exact sigmoid: EUP exp + VPU divide
        o_ref[:, 0, :] = (1.0 / (1.0 + jnp.exp(-acc))).astype(o_ref.dtype)


def _largest_divisor_at_most(total, target):
    target = max(1, min(total, target))
    for cand in range(target, 0, -1):
        if total % cand == 0:
            return cand
    return 1


def sp_attention(x, weight):
    """SpAttention forward.  x: (N, C, H, W); weight: (1, 1, k, k), k in {3, 7}."""
    n, c, h, w = x.shape
    ksize = weight.shape[-1]
    pad = ksize // 2
    hw = h * w
    lpad = (pad * w + pad + 127) // 128 * 128        # lane-aligned zero pad

    # Lane-dense views of the activations: metadata-only reshapes (contiguous).
    xr = x.reshape(n, c, hw)

    # Column-boundary masks (weight/shape metadata only, no activation traffic):
    #   cmask[j, y*W + x] = 1  iff  0 <= x + (j - pad) < W
    col = jnp.arange(hw, dtype=jnp.int32) % w
    cmask = jnp.stack(
        [((col + (j - pad) >= 0) & (col + (j - pad) < w)).astype(jnp.float32)
         for j in range(ksize)])                                   # (k, H*W)

    wts = weight.reshape(ksize, ksize).astype(jnp.float32)         # -> SMEM

    # Block sizing: a few MiB per (double-buffered) input block, >= 2 batch
    # steps when N >= 2 (v7x dual TensorCore), C tiled only when a single
    # image's channels alone would blow the VMEM budget.
    itemsize = x.dtype.itemsize
    budget = 4 << 20
    bn = _largest_divisor_at_most(
        n, min(n // 2 if n >= 2 else 1,
               max(1, budget // max(1, c * hw * itemsize))))
    ct = _largest_divisor_at_most(c, max(1, budget // max(1, bn * hw * itemsize)))
    grid = (n // bn, c // ct)

    kernel = functools.partial(_sp_attention_kernel, ksize=ksize, width=w,
                               hw=hw, lpad=lpad)

    out = pl.pallas_call(
        kernel,
        out_shape=jax.ShapeDtypeStruct((n, 1, hw), x.dtype),
        grid_spec=pltpu.PrefetchScalarGridSpec(
            num_scalar_prefetch=0,
            grid=grid,                               # (batch blocks, C blocks)
            in_specs=[
                pl.BlockSpec(memory_space=pltpu.MemorySpace.SMEM),     # weights
                pl.BlockSpec((bn, ct, hw), lambda b, cc: (b, cc, 0)),  # x
                pl.BlockSpec((ksize, hw), lambda b, cc: (0, 0)),       # col masks
            ],
            out_specs=pl.BlockSpec((bn, 1, hw), lambda b, cc: (b, 0, 0)),
            scratch_shapes=[
                pltpu.VMEM((bn, hw), jnp.float32),                # running max
                pltpu.VMEM((bn, 2 * lpad + hw), jnp.float32),     # padded max map
            ],
        ),
        compiler_params=pltpu.CompilerParams(
            dimension_semantics=("parallel", "arbitrary"),
        ),
        cost_estimate=pl.CostEstimate(
            flops=int(n * hw * (c + 3 * ksize * ksize + 4)),
            transcendentals=int(n * hw),
            bytes_accessed=int((n * c * hw + n * hw) * itemsize),
        ),
    )(wts, xr, cmask)

    return out.reshape(n, 1, h, w)


if __name__ == "__main__":
    key = jax.random.PRNGKey(0)
    k_x, k_w = jax.random.split(key, 2)

    N, C, H, W = 2, 4, 16, 16
    KS = 3                                   # kernel_size=3 branch of the module
    PAD = KS // 2

    x = jax.random.normal(k_x, (N, C, H, W), jnp.float32)
    bound = 1.0 / (1 * KS * KS) ** 0.5       # PyTorch Conv2d default init bound
    weight = jax.random.uniform(k_w, (1, 1, KS, KS), jnp.float32, -bound, bound)

    out = sp_attention(x, weight)
    jax.block_until_ready(out)

    # Pure-JAX f32 reference of the SpAttention forward (no MXU in the kernel
    # anymore, so no bf16 snapping needed).
    m_ref = jnp.max(x, axis=1)                                   # (N, H, W)
    mp = jnp.pad(m_ref, ((0, 0), (PAD, PAD), (PAD, PAD)))
    wt_ref = weight.reshape(KS, KS)
    conv_ref = sum(wt_ref[i, j] * mp[:, i:i + H, j:j + W]
                   for i in range(KS) for j in range(KS))
    ref = (1.0 / (1.0 + jnp.exp(-conv_ref)))[:, None, :, :]      # (N, 1, H, W)

    assert out.shape == (N, 1, H, W)
    assert jnp.allclose(out, ref, atol=1e-5, rtol=1e-5)

    print("KERNEL_OK")
</pallas_src>

<mosaic_0001>
module attributes {stable_mosaic.version = 11 : i64} {
  func.func @_sp_attention_kernel(%arg0: i32, %arg1: i32, %arg2: memref<3x3xf32, #tpu.memory_space<smem>>, %arg3: memref<1x4x256xf32, #tpu.memory_space<vmem>>, %arg4: memref<3x256xf32, #tpu.memory_space<vmem>>, %arg5: memref<1x1x256xf32, #tpu.memory_space<vmem>>, %arg6: memref<1x256xf32, #tpu.memory_space<vmem>>, %arg7: memref<1x512xf32, #tpu.memory_space<vmem>>) attributes {dimension_semantics = [#tpu.dimension_semantics<parallel>, #tpu.dimension_semantics<arbitrary>], iteration_bounds = array<i64: 2, 1>, scalar_prefetch = 0 : i64, scratch_operands = 2 : i64, tpu.core_type = #tpu.core_type<tc>, window_params = [{transform_indices = @transform_0, window_bounds = array<i64: 3, 3>}, {transform_indices = @transform_1, window_bounds = array<i64: 1, 4, 256>}, {pipeline_mode = #tpu.pipeline_mode<synchronous>, transform_indices = @transform_2, window_bounds = array<i64: 3, 256>}, {transform_indices = @transform_3, window_bounds = array<i64: 1, 1, 256>}]} {
    %c0_i32 = arith.constant 0 : i32
    %0 = arith.cmpi eq, %arg1, %c0_i32 : i32
    %1 = arith.extui %0 : i1 to i32
    %c0_i32_0 = arith.constant 0 : i32
    %2 = arith.cmpi ne, %1, %c0_i32_0 : i32
    scf.if %2 {
      %cst_9 = arith.constant 0xFF800000 : f32
      %11 = vector.broadcast %cst_9 : f32 to vector<1x256xf32>
      %c0_10 = arith.constant 0 : index
      %c0_11 = arith.constant 0 : index
      %12 = vector.load %arg6[%c0_10, %c0_11] : memref<1x256xf32, #tpu.memory_space<vmem>>, vector<1x256xf32>
      tpu.vector_store %arg6[%c0_10, %c0_11], %11 {strides = array<i32>} : memref<1x256xf32, #tpu.memory_space<vmem>>, vector<1x256xf32>,
    } else {
    }
    %c0 = arith.constant 0 : index
    %c0_1 = arith.constant 0 : index
    %c0_2 = arith.constant 0 : index
    %3 = vector.load %arg3[%c0, %c0_1, %c0_2] : memref<1x4x256xf32, #tpu.memory_space<vmem>>, vector<1x4x256xf32>
    %cst = arith.constant dense<0xFF800000> : vector<1x256xf32>
    %4 = vector.multi_reduction <maximumf>, %3, %cst [1] : vector<1x4x256xf32> to vector<1x256xf32>
    %c0_3 = arith.constant 0 : index
    %c0_4 = arith.constant 0 : index
    %5 = vector.load %arg6[%c0_3, %c0_4] : memref<1x256xf32, #tpu.memory_space<vmem>>, vector<1x256xf32>
    %6 = arith.maximumf %5, %4 : vector<1x256xf32>
    %c0_5 = arith.constant 0 : index
    %c0_6 = arith.constant 0 : index
    %7 = vector.load %arg6[%c0_5, %c0_6] : memref<1x256xf32, #tpu.memory_space<vmem>>, vector<1x256xf32>
    tpu.vector_store %arg6[%c0_5, %c0_6], %6 {strides = array<i32>} : memref<1x256xf32, #tpu.memory_space<vmem>>, vector<1x256xf32>,
    %c0_i32_7 = arith.constant 0 : i32
    %8 = arith.cmpi eq, %arg1, %c0_i32_7 : i32
    %9 = arith.extui %8 : i1 to i32
    %c0_i32_8 = arith.constant 0 : i32
    %10 = arith.cmpi ne, %9, %c0_i32_8 : i32
    scf.if %10 {
      %cst_9 = arith.constant 0.000000e+00 : f32
      %11 = vector.broadcast %cst_9 : f32 to vector<1x512xf32>
      %c0_10 = arith.constant 0 : index
      %c0_11 = arith.constant 0 : index
      %12 = vector.load %arg7[%c0_10, %c0_11] : memref<1x512xf32, #tpu.memory_space<vmem>>, vector<1x512xf32>
      tpu.vector_store %arg7[%c0_10, %c0_11], %11 {strides = array<i32>} : memref<1x512xf32, #tpu.memory_space<vmem>>, vector<1x512xf32>,
      %c0_12 = arith.constant 0 : index
      %c0_13 = arith.constant 0 : index
      %13 = vector.load %arg6[%c0_12, %c0_13] : memref<1x256xf32, #tpu.memory_space<vmem>>, vector<1x256xf32>
      %c0_14 = arith.constant 0 : index
      %c128 = arith.constant 128 : index
      %14 = vector.load %arg7[%c0_14, %c128] : memref<1x512xf32, #tpu.memory_space<vmem>>, vector<1x256xf32>
      tpu.vector_store %arg7[%c0_14, %c128], %13 {strides = array<i32>} : memref<1x512xf32, #tpu.memory_space<vmem>>, vector<1x256xf32>,
      %cst_15 = arith.constant 0.000000e+00 : f32
      %15 = vector.broadcast %cst_15 : f32 to vector<1x256xf32>
      %c0_16 = arith.constant 0 : index
      %c111 = arith.constant 111 : index
      %16 = vector.load %arg7[%c0_16, %c111] : memref<1x512xf32, #tpu.memory_space<vmem>>, vector<1x256xf32>
      %c0_17 = arith.constant 0 : index
      %c0_18 = arith.constant 0 : index
      %17 = memref.load %arg2[%c0_17, %c0_18] : memref<3x3xf32, #tpu.memory_space<smem>>
      %c0_19 = arith.constant 0 : index
      %c0_20 = arith.constant 0 : index
      %18 = vector.load %arg4[%c0_19, %c0_20] : memref<3x256xf32, #tpu.memory_space<vmem>>, vector<1x256xf32>
      %19 = vector.broadcast %17 : f32 to vector<1x256xf32>
      %20 = arith.mulf %19, %18 : vector<1x256xf32>
      %21 = arith.mulf %20, %16 : vector<1x256xf32>
      %22 = arith.addf %15, %21 : vector<1x256xf32>
      %c0_21 = arith.constant 0 : index
      %c112 = arith.constant 112 : index
      %23 = vector.load %arg7[%c0_21, %c112] : memref<1x512xf32, #tpu.memory_space<vmem>>, vector<1x256xf32>
      %c0_22 = arith.constant 0 : index
      %c1 = arith.constant 1 : index
      %24 = memref.load %arg2[%c0_22, %c1] : memref<3x3xf32, #tpu.memory_space<smem>>
      %c1_23 = arith.constant 1 : index
      %c0_24 = arith.constant 0 : index
      %25 = vector.load %arg4[%c1_23, %c0_24] : memref<3x256xf32, #tpu.memory_space<vmem>>, vector<1x256xf32>
      %26 = vector.broadcast %24 : f32 to vector<1x256xf32>
      %27 = arith.mulf %26, %25 : vector<1x256xf32>
      %28 = arith.mulf %27, %23 : vector<1x256xf32>
      %29 = arith.addf %22, %28 : vector<1x256xf32>
      %c0_25 = arith.constant 0 : index
      %c113 = arith.constant 113 : index
      %30 = vector.load %arg7[%c0_25, %c113] : memref<1x512xf32, #tpu.memory_space<vmem>>, vector<1x256xf32>
      %c0_26 = arith.constant 0 : index
      %c2 = arith.constant 2 : index
      %31 = memref.load %arg2[%c0_26, %c2] : memref<3x3xf32, #tpu.memory_space<smem>>
      %c2_27 = arith.constant 2 : index
      %c0_28 = arith.constant 0 : index
      %32 = vector.load %arg4[%c2_27, %c0_28] : memref<3x256xf32, #tpu.memory_space<vmem>>, vector<1x256xf32>
      %33 = vector.broadcast %31 : f32 to vector<1x256xf32>
      %34 = arith.mulf %33, %32 : vector<1x256xf32>
      %35 = arith.mulf %34, %30 : vector<1x256xf32>
      %36 = arith.addf %29, %35 : vector<1x256xf32>
      %c0_29 = arith.constant 0 : index
      %c127 = arith.constant 127 : index
      %37 = vector.load %arg7[%c0_29, %c127] : memref<1x512xf32, #tpu.memory_space<vmem>>, vector<1x256xf32>
      %c1_30 = arith.constant 1 : index
      %c0_31 = arith.constant 0 : index
      %38 = memref.load %arg2[%c1_30, %c0_31] : memref<3x3xf32, #tpu.memory_space<smem>>
      %c0_32 = arith.constant 0 : index
      %c0_33 = arith.constant 0 : index
      %39 = vector.load %arg4[%c0_32, %c0_33] : memref<3x256xf32, #tpu.memory_space<vmem>>, vector<1x256xf32>
      %40 = vector.broadcast %38 : f32 to vector<1x256xf32>
      %41 = arith.mulf %40, %39 : vector<1x256xf32>
      %42 = arith.mulf %41, %37 : vector<1x256xf32>
      %43 = arith.addf %36, %42 : vector<1x256xf32>
      %c0_34 = arith.constant 0 : index
      %c128_35 = arith.constant 128 : index
      %44 = vector.load %arg7[%c0_34, %c128_35] : memref<1x512xf32, #tpu.memory_space<vmem>>, vector<1x256xf32>
      %c1_36 = arith.constant 1 : index
      %c1_37 = arith.constant 1 : index
      %45 = memref.load %arg2[%c1_36, %c1_37] : memref<3x3xf32, #tpu.memory_space<smem>>
      %c1_38 = arith.constant 1 : index
      %c0_39 = arith.constant 0 : index
      %46 = vector.load %arg4[%c1_38, %c0_39] : memref<3x256xf32, #tpu.memory_space<vmem>>, vector<1x256xf32>
      %47 = vector.broadcast %45 : f32 to vector<1x256xf32>
      %48 = arith.mulf %47, %46 : vector<1x256xf32>
      %49 = arith.mulf %48, %44 : vector<1x256xf32>
      %50 = arith.addf %43, %49 : vector<1x256xf32>
      %c0_40 = arith.constant 0 : index
      %c129 = arith.constant 129 : index
      %51 = vector.load %arg7[%c0_40, %c129] : memref<1x512xf32, #tpu.memory_space<vmem>>, vector<1x256xf32>
      %c1_41 = arith.constant 1 : index
      %c2_42 = arith.constant 2 : index
      %52 = memref.load %arg2[%c1_41, %c2_42] : memref<3x3xf32, #tpu.memory_space<smem>>
      %c2_43 = arith.constant 2 : index
      %c0_44 = arith.constant 0 : index
      %53 = vector.load %arg4[%c2_43, %c0_44] : memref<3x256xf32, #tpu.memory_space<vmem>>, vector<1x256xf32>
      %54 = vector.broadcast %52 : f32 to vector<1x256xf32>
      %55 = arith.mulf %54, %53 : vector<1x256xf32>
      %56 = arith.mulf %55, %51 : vector<1x256xf32>
      %57 = arith.addf %50, %56 : vector<1x256xf32>
      %c0_45 = arith.constant 0 : index
      %c143 = arith.constant 143 : index
      %58 = vector.load %arg7[%c0_45, %c143] : memref<1x512xf32, #tpu.memory_space<vmem>>, vector<1x256xf32>
      %c2_46 = arith.constant 2 : index
      %c0_47 = arith.constant 0 : index
      %59 = memref.load %arg2[%c2_46, %c0_47] : memref<3x3xf32, #tpu.memory_space<smem>>
      %c0_48 = arith.constant 0 : index
      %c0_49 = arith.constant 0 : index
      %60 = vector.load %arg4[%c0_48, %c0_49] : memref<3x256xf32, #tpu.memory_space<vmem>>, vector<1x256xf32>
      %61 = vector.broadcast %59 : f32 to vector<1x256xf32>
      %62 = arith.mulf %61, %60 : vector<1x256xf32>
      %63 = arith.mulf %62, %58 : vector<1x256xf32>
      %64 = arith.addf %57, %63 : vector<1x256xf32>
      %c0_50 = arith.constant 0 : index
      %c144 = arith.constant 144 : index
      %65 = vector.load %arg7[%c0_50, %c144] : memref<1x512xf32, #tpu.memory_space<vmem>>, vector<1x256xf32>
      %c2_51 = arith.constant 2 : index
      %c1_52 = arith.constant 1 : index
      %66 = memref.load %arg2[%c2_51, %c1_52] : memref<3x3xf32, #tpu.memory_space<smem>>
      %c1_53 = arith.constant 1 : index
      %c0_54 = arith.constant 0 : index
      %67 = vector.load %arg4[%c1_53, %c0_54] : memref<3x256xf32, #tpu.memory_space<vmem>>, vector<1x256xf32>
      %68 = vector.broadcast %66 : f32 to vector<1x256xf32>
      %69 = arith.mulf %68, %67 : vector<1x256xf32>
      %70 = arith.mulf %69, %65 : vector<1x256xf32>
      %71 = arith.addf %64, %70 : vector<1x256xf32>
      %c0_55 = arith.constant 0 : index
      %c145 = arith.constant 145 : index
      %72 = vector.load %arg7[%c0_55, %c145] : memref<1x512xf32, #tpu.memory_space<vmem>>, vector<1x256xf32>
      %c2_56 = arith.constant 2 : index
      %c2_57 = arith.constant 2 : index
      %73 = memref.load %arg2[%c2_56, %c2_57] : memref<3x3xf32, #tpu.memory_space<smem>>
      %c2_58 = arith.constant 2 : index
      %c0_59 = arith.constant 0 : index
      %74 = vector.load %arg4[%c2_58, %c0_59] : memref<3x256xf32, #tpu.memory_space<vmem>>, vector<1x256xf32>
      %75 = vector.broadcast %73 : f32 to vector<1x256xf32>
      %76 = arith.mulf %75, %74 : vector<1x256xf32>
      %77 = arith.mulf %76, %72 : vector<1x256xf32>
      %78 = arith.addf %71, %77 : vector<1x256xf32>
      %cst_60 = arith.constant 0.000000e+00 : f32
      %79 = vector.broadcast %cst_60 : f32 to vector<1x256xf32>
      %80 = arith.subf %79, %78 : vector<1x256xf32>
      %81 = math.exp %80 : vector<1x256xf32>
      %cst_61 = arith.constant 1.000000e+00 : f32
      %82 = vector.broadcast %cst_61 : f32 to vector<1x256xf32>
      %83 = arith.addf %82, %81 : vector<1x256xf32>
      %cst_62 = arith.constant 1.000000e+00 : f32
      %84 = vector.broadcast %cst_62 : f32 to vector<1x256xf32>
      %85 = arith.divf %84, %83 : vector<1x256xf32>
      %c0_63 = arith.constant 0 : index
      %c0_64 = arith.constant 0 : index
      %c0_65 = arith.constant 0 : index
      %86 = vector.load %arg5[%c0_63, %c0_64, %c0_65] : memref<1x1x256xf32, #tpu.memory_space<vmem>>, vector<1x1x256xf32>
      %87 = vector.shape_cast %86 : vector<1x1x256xf32> to vector<1x256xf32>
      %88 = vector.shape_cast %85 : vector<1x256xf32> to vector<1x1x256xf32>
      tpu.vector_store %arg5[%c0_63, %c0_64, %c0_65], %88 {strides = array<i32>} : memref<1x1x256xf32, #tpu.memory_space<vmem>>, vector<1x1x256xf32>,
    } else {
    }
    return
  }
  func.func @transform_0(%arg0: i32, %arg1: i32) -> (i32, i32) {
    %c0_i32 = arith.constant 0 : i32
    %c0_i32_0 = arith.constant 0 : i32
    %c0_i32_1 = arith.constant 0 : i32
    return %c0_i32, %c0_i32_0 : i32, i32
  }
  func.func @transform_1(%arg0: i32, %arg1: i32) -> (i32, i32, i32) {
    %c0_i32 = arith.constant 0 : i32
    %c0_i32_0 = arith.constant 0 : i32
    return %arg0, %arg1, %c0_i32 : i32, i32, i32
  }
  func.func @transform_2(%arg0: i32, %arg1: i32) -> (i32, i32) {
    %c0_i32 = arith.constant 0 : i32
    %c0_i32_0 = arith.constant 0 : i32
    %c0_i32_1 = arith.constant 0 : i32
    return %c0_i32, %c0_i32_0 : i32, i32
  }
  func.func @transform_3(%arg0: i32, %arg1: i32) -> (i32, i32, i32) {
    %c0_i32 = arith.constant 0 : i32
    %c0_i32_0 = arith.constant 0 : i32
    %c0_i32_1 = arith.constant 0 : i32
    return %arg0, %c0_i32, %c0_i32_0 : i32, i32, i32
  }
}

</mosaic_0001>

<llo_original>
// kernel: tpu_custom_call.1
$region0: #{tpu_custom_call.1}
  #allocation0 [shape = 'u32[]', space=smem, size = 0x4, offset = 0x4, fixed_abs, tag = 'smem constant byte address 0x4 - core index']
  #allocation1 [shape = 'u32[144,128]{1,0:T(1,128)}', space=vmem, size = 0x12000, scoped, tag = 'internal scratch']
  #allocation2 [shape = 'f32[1,256]{1,0:T(1,128)}', space=vmem, size = 0x400, scoped, tag = 'scratch operand']
  #allocation3 [shape = 'f32[1,512]{1,0:T(1,128)}', space=vmem, size = 0x800, scoped, tag = 'scratch operand']
  %s0 = inlined_call_operand.hbm [shape: f32[3,3], index: 0, kind: input, shape index: {}]
  %s1 = inlined_call_operand.hbm [shape: f32[2,4,256], index: 1, kind: input, shape index: {}]
  %s2 = inlined_call_operand.hbm [shape: f32[3,256], index: 2, kind: input, shape index: {}]
  %s3 = inlined_call_operand.hbm [shape: f32[2,1,256], index: 3, kind: output, shape index: {}]
  %s4 = sld [smem:[#allocation0]]
  $region65: #{tpu_custom_call.1} parent=0
    _
  %s6 = ssub.s32 1, %s4
  %s7 = scalar_select 0, %s6, %s4
  $region1: #{tpu_custom_call.1} parent=0
    #allocation4 [shape = 'u8[2048]{0}', space=smem, size = 0x800, scoped, tag = 'input window, operand 0, single buffered']
    #allocation5 [shape = 's32[2]{0}', space=sflag, size = 0x8, scoped, tag = 'scoped memory for tpu_custom_call.1']
    #allocation6 [shape = 's32[2]{0}', space=sflag, size = 0x8, scoped, tag = 'scoped memory for tpu_custom_call.1']
    #allocation7 [shape = 's32[2]{0}', space=sflag, size = 0x8, scoped, tag = 'scoped memory for tpu_custom_call.1']
    #allocation8 [shape = 'u8[8192]{0}', space=vmem, size = 0x2000, scoped, tag = 'input window, operand 1']
    #allocation9 [shape = 'u8[4096]{0}', space=vmem, size = 0x1000, scoped, tag = 'input window, operand 2, single buffered']
    #allocation10 [shape = 's32[1]{0}', space=sflag, size = 0x4, scoped, tag = 'scoped memory for tpu_custom_call.1']
    #allocation11 [shape = 'u8[2048]{0}', space=vmem, size = 0x800, scoped, tag = 'output window, operand 0']
    %8 = vsyncpa [#allocation7], 0
    %9 = vsyncpa [#allocation5], 0
    %s10 = scalar_lea.sflag [#allocation5], 1
    %11 = vsyncpa %s10, 0
    %12 = vsyncpa [#allocation10], 0
    %13 = vsyncpa [#allocation6], 0
    %s14 = scalar_lea.sflag [#allocation6], 1
    %15 = vsyncpa %s14, 0
    loop: start=0, step=1, limit=4
    $region2: #{tpu_custom_call.1} parent=1 // loop_pre_header
      _
    $region3: #{tpu_custom_call.1} parent=1 // loop_header
      %s17 = sphi 0, %s21
      %p18 = scmp.ge.s32.totalorder %s17, 4
      %s24 = sphi 0, %s36
      %s25 = sphi 0, %s32
      %s26 = sphi 0, %s24
      %s27 = sphi 0, %s25
      %s28 = sphi 0, %s26
      %s29 = sphi 0, %s27
      %s37 = sphi 0, %s37
      %s39 = sphi 0, %s37
      %s40 = sphi 0, %s39
      %s54 = sphi 0, %s40
      %s62 = sphi 0, %s64
      %s65 = sphi 0, %s62
      %s66 = sphi 0, %s65
      %s82 = sphi 0, %s66
      %s86 = sphi 0, %s86
      %s88 = sphi 0, %s86
      %s89 = sphi 0, %s88
      %s103 = sphi 0, %s89
      %s109 = sphi 0, %s111
      %s112 = sphi 0, %s109
      %s113 = sphi 0, %s112
      %s129 = sphi 0, %s113
    $region4: #{tpu_custom_call.1} parent=1 // loop_header_branch
      %20 = sbr.rel (%p18) target = $region8
    $region5: #{tpu_custom_call.1} parent=1 // loop_body
      %s22 = ssub.s32 %s17, 1
      %s23 = ssub.s32 %s17, 2
      %s30 = sadd.s32 1, %s25
      %p31 = scmp.ge.s32.totalorder %s30, 1
      %s32 = scalar_select %p31, 0, %s30
      %s33 = sadd.s32 1, %s24
      %s34 = scalar_select %p31, %s33, %s24
      %p35 = scmp.ge.s32.totalorder %s34, 2
      %s36 = scalar_select %p35, 0, %s34
      %s38 = sadd.s32 %s37, 1
      %p41 = scmp.eq.s32.totalorder %s17, 1
      %p42 = scmp.ne.s32.totalorder %s37, %s39
      %p43 = scmp.eq.s32.totalorder %s17, 0
      %p44 = por %p42, %p43
      %p45 = scmp.ne.s32.totalorder %s37, %s39
      %p46 = scmp.eq.s32.totalorder %s22, 1
      %p47 = por %p45, %p46
      %p48 = scmp.ne.s32.totalorder %s39, %s40
      %p49 = scmp.eq.s32.totalorder %s22, 0
      %p50 = por %p48, %p49
      %p51 = scmp.ne.s32.totalorder %s39, %s40
      %p52 = scmp.eq.s32.totalorder %s23, 1
      %p53 = por %p51, %p52
      %p55 = scmp.ne.s32.totalorder %s40, %s54
      %p56 = scmp.eq.s32.totalorder %s23, 0
      %p57 = por %p55, %p56
      %s58 = ssub.s32 %s24, %s36
      %s59 = ssub.s32 %s25, %s32
      %s60 = sor.u32 %s58, %s59
      %p61 = scmp.eq.s32.totalorder %s60, 0
      %s63 = sadd.s32 %s62, 1
      %s64 = scalar_select %p61, %s62, %s63
      %p67 = pneg %p61
      %p68 = scmp.eq.s32.totalorder %s17, 1
      %p69 = por %p67, %p68
      %p70 = scmp.ne.s32.totalorder %s62, %s65
      %p71 = scmp.eq.s32.totalorder %s17, 0
      %p72 = por %p70, %p71
      %p73 = scmp.ne.s32.totalorder %s62, %s65
      %p74 = scmp.eq.s32.totalorder %s22, 1
      %p75 = por %p73, %p74
      %p76 = scmp.ne.s32.totalorder %s65, %s66
      %p77 = scmp.eq.s32.totalorder %s22, 0
      %p78 = por %p76, %p77
      %p79 = scmp.ne.s32.totalorder %s65, %s66
      %p80 = scmp.eq.s32.totalorder %s23, 1
      %p81 = por %p79, %p80
      %p83 = scmp.ne.s32.totalorder %s66, %s82
      %p84 = scmp.eq.s32.totalorder %s23, 0
      %p85 = por %p83, %p84
      %s87 = sadd.s32 %s86, 1
      %p90 = scmp.eq.s32.totalorder %s17, 1
      %p91 = scmp.ne.s32.totalorder %s86, %s88
      %p92 = scmp.eq.s32.totalorder %s17, 0
      %p93 = por %p91, %p92
      %p94 = scmp.ne.s32.totalorder %s86, %s88
      %p95 = scmp.eq.s32.totalorder %s22, 1
      %p96 = por %p94, %p95
      %p97 = scmp.ne.s32.totalorder %s88, %s89
      %p98 = scmp.eq.s32.totalorder %s22, 0
      %p99 = por %p97, %p98
      %p100 = scmp.ne.s32.totalorder %s88, %s89
      %p101 = scmp.eq.s32.totalorder %s23, 1
      %p102 = por %p100, %p101
      %p104 = scmp.ne.s32.totalorder %s89, %s103
      %p105 = scmp.eq.s32.totalorder %s23, 0
      %p106 = por %p104, %p105
      %s107 = ssub.s32 %s24, %s36
      %p108 = scmp.eq.s32.totalorder %s107, 0
      %s110 = sadd.s32 %s109, 1
      %s111 = scalar_select %p108, %s109, %s110
      %p114 = pneg %p108
      %p115 = scmp.eq.s32.totalorder %s17, 1
      %p116 = por %p114, %p115
      %p117 = scmp.ne.s32.totalorder %s109, %s112
      %p118 = scmp.eq.s32.totalorder %s17, 0
      %p119 = por %p117, %p118
      %p120 = scmp.ne.s32.totalorder %s109, %s112
      %p121 = scmp.eq.s32.totalorder %s22, 1
      %p122 = por %p120, %p121
      %p123 = scmp.ne.s32.totalorder %s112, %s113
      %p124 = scmp.eq.s32.totalorder %s22, 0
      %p125 = por %p123, %p124
      %p126 = scmp.ne.s32.totalorder %s112, %s113
      %p127 = scmp.eq.s32.totalorder %s23, 1
      %p128 = por %p126, %p127
      %p130 = scmp.ne.s32.totalorder %s113, %s129
      %p131 = scmp.eq.s32.totalorder %s23, 0
      %p132 = por %p130, %p131
      %p133 = scmp.le.s32.totalorder 1, %s17
      %p134 = scmp.lt.s32.totalorder %s17, 3
      %p135 = pnand %p133, %p134
      %p136 = pneg %p135
      // Predicated region
      $region9: #{tpu_custom_call.1} parent=5 // pred_check
        _
      $region10: #{tpu_custom_call.1} parent=5 // pred_check_branch
        %138 = sbr.rel (%p135) target = $region12
      $region11: #{tpu_custom_call.1} parent=5 // pred_region
        %s139 = ssub.s32 %s17, 1
        // Predicated region
        $region13: #{tpu_custom_call.1} parent=11 // pred_check
          %p140 = pneg %p50
        $region14: #{tpu_custom_call.1} parent=11 // pred_check_branch
          %142 = sbr.rel (%p140) target = $region16
        $region15: #{tpu_custom_call.1} parent=11 // pred_region
          %s144 = ssub.s32 64, 64
          %145 = vsyncadd [#allocation7], %s144
          %148 = dma.hbm_to_smem %s0, 64, [#allocation4], [#allocation7]
        $region16: #{tpu_custom_call.1} parent=11 // pred_fallthru
          _
        // Predicated region
        $region17: #{tpu_custom_call.1} parent=11 // pred_check
          %p149 = pneg %p99
        $region18: #{tpu_custom_call.1} parent=11 // pred_check_branch
          %151 = sbr.rel (%p149) target = $region20
        $region19: #{tpu_custom_call.1} parent=11 // pred_region
          %s153 = ssub.s32 128, 128
          %154 = vsyncadd [#allocation10], %s153
          %s156 = sshll.u32 [#allocation9], 4
          %s157 = int_to_ptr.vmem [resolvable:$true] %s156
          %159 = dma.hbm_to_vmem [thread:$0]  %s2, 128, %s157, [#allocation10]
        $region20: #{tpu_custom_call.1} parent=11 // pred_fallthru
          _
      $region12: #{tpu_custom_call.1} parent=5 // pred_fallthru
        _
      %p160 = scmp.lt.s32.totalorder %s17, 2
      // Predicated region
      $region21: #{tpu_custom_call.1} parent=5 // pred_check
        %p161 = pneg %p160
      $region22: #{tpu_custom_call.1} parent=5 // pred_check_branch
        %163 = sbr.rel (%p161) target = $region24
      $region23: #{tpu_custom_call.1} parent=5 // pred_region
        // Predicated region
        $region25: #{tpu_custom_call.1} parent=23 // pred_check
          %p164 = pneg %p72
        $region26: #{tpu_custom_call.1} parent=23 // pred_check_branch
          %166 = sbr.rel (%p164) target = $region28
        $region27: #{tpu_custom_call.1} parent=23 // pred_region
          %s167 = sand.u32 %s62, 1
          %s168 = scalar_lea.sflag [#allocation5], %s167
          %s169 = sand.u32 %s62, 1
          %s170 = smul.addr %s169, 8
          %s171 = scalar_lea.vmem [#allocation8], %s170
          %s173 = ssub.s32 128, 128
          %174 = vsyncadd %s168, %s173
          %s175 = smul.addr %s25, 2
          %s176 = smul.addr %s24, 2
          %s177 = sadd.s32 %s175, %s176
          %s178 = smul.addr %s177, 64
          %s179 = scalar_lea.hbm %s1, %s178
          %s181 = sshll.u32 %s171, 4
          %s182 = int_to_ptr.vmem [resolvable:$true] %s181
          %184 = dma.hbm_to_vmem [thread:$0]  %s179, 128, %s182, %s168
        $region28: #{tpu_custom_call.1} parent=23 // pred_fallthru
          _
      $region24: #{tpu_custom_call.1} parent=5 // pred_fallthru
        _
      %p185 = scmp.le.s32.totalorder 1, %s17
      %p186 = scmp.lt.s32.totalorder %s17, 3
      %p187 = pnand %p185, %p186
      %p188 = pneg %p187
      // Predicated region
      $region29: #{tpu_custom_call.1} parent=5 // pred_check
        _
      $region30: #{tpu_custom_call.1} parent=5 // pred_check_branch
        %190 = sbr.rel (%p187) target = $region32
      $region31: #{tpu_custom_call.1} parent=5 // pred_region
        %s191 = ssub.s32 %s17, 1
        // Predicated region
        $region33: #{tpu_custom_call.1} parent=31 // pred_check
          %p192 = pneg %p50
        $region34: #{tpu_custom_call.1} parent=31 // pred_check_branch
          %194 = sbr.rel (%p192) target = $region36
        $region35: #{tpu_custom_call.1} parent=31 // pred_region
          %195 = dma.done [#allocation7], 64
        $region36: #{tpu_custom_call.1} parent=31 // pred_fallthru
          _
        %s196 = sand.u32 %s65, 1
        %s197 = scalar_lea.sflag [#allocation5], %s196
        %s198 = sand.u32 %s65, 1
        %s199 = smul.addr %s198, 8
        %s200 = scalar_lea.vmem [#allocation8], %s199
        // Predicated region
        $region37: #{tpu_custom_call.1} parent=31 // pred_check
          %p201 = pneg %p78
        $region38: #{tpu_custom_call.1} parent=31 // pred_check_branch
          %203 = sbr.rel (%p201) target = $region40
        $region39: #{tpu_custom_call.1} parent=31 // pred_region
          %204 = dma.done %s197, 128
        $region40: #{tpu_custom_call.1} parent=31 // pred_fallthru
          _
        // Predicated region
        $region41: #{tpu_custom_call.1} parent=31 // pred_check
          %p205 = pneg %p99
        $region42: #{tpu_custom_call.1} parent=31 // pred_check_branch
          %207 = sbr.rel (%p205) target = $region44
        $region43: #{tpu_custom_call.1} parent=31 // pred_region
          %208 = dma.done [#allocation10], 128
        $region44: #{tpu_custom_call.1} parent=31 // pred_fallthru
          _
        %209 = sfence
        %p210 = pneg %p50
        %p211 = pneg %p47
        %s212 = sand.u32 %s65, 1
        %s213 = scalar_lea.sflag [#allocation5], %s212
        %s214 = sand.u32 %s65, 1
        %s215 = smul.addr %s214, 8
        %s216 = scalar_lea.vmem [#allocation8], %s215
        %p217 = pneg %p78
        %p218 = pneg %p75
        %p219 = pneg %p99
        %p220 = pneg %p96
        %p221 = pneg %p125
        %p222 = pneg %p122
        %s223 = sand.u32 %s112, 1
        %s224 = scalar_lea.sflag [#allocation6], %s223
        %s225 = sand.u32 %s112, 1
        %s226 = smul.addr %s225, 2
        %s227 = scalar_lea.vmem [#allocation11], %s226
        %p228 = scmp.eq.s32.totalorder %s27, 0
        // Predicated region
        $region45: #{tpu_custom_call.1} parent=31 // pred_check
          %p229 = pneg %p228
        $region46: #{tpu_custom_call.1} parent=31 // pred_check_branch
          %231 = sbr.rel (%p229) target = $region48
        $region47: #{tpu_custom_call.1} parent=31 // pred_region
          %v232 = vlaneseq
          %vm233 = vcmp.ge.s32.totalorder %v232, 0
          %vm234 = vcmp.lt.s32.totalorder %v232, 256
          %vm235 = vmand %vm233, %vm234
          %236 = vst.msk [vmem:[#allocation2] sm:$0x3] %vm235, -inf
        $region48: #{tpu_custom_call.1} parent=31 // pred_fallthru
          _
        %v237 = vld [vmem:[%s200] sm:$0xff]
        %v239 = vcombine.high %v237, %v237
        %vm241 = vcmask 1043456
        %v242 = vsel %vm241, %v237, -inf
        %v243 = vrot.slane %v242, 4
        %v244 = vmax.f32 %v242, %v243
        %v245 = vrot.slane %v244, 2
        %v246 = vmax.f32 %v244, %v245
        %v247 = vrot.slane %v246, 1
        %v248 = vmax.f32 %v246, %v247
        %v249 = vsel %vm241, %v239, -inf
        %v250 = vrot.slane %v249, 4
        %v251 = vmax.f32 %v249, %v250
        %v252 = vrot.slane %v251, 2
        %v253 = vmax.f32 %v251, %v252
        %v254 = vrot.slane %v253, 1
        %v255 = vmax.f32 %v253, %v254
        %v256 = vld [vmem:[#allocation2] sm:$0x3]
        %v259 = vcombine.low %v248, %v255
        %v261 = vunpack.c.l.s4 1966171168
        %v262 = vunpack.c.0.s8 %v261
        %v263 = vlaneseq
        %v264 = vshrl.u32 %v263, 7
        %v265 = vsub.s32 %v262, %v264
        %v266 = vrot.slane %v259, %v265
        %v268 = vunpack.c.l.s4 1966171168
        %v269 = vunpack.c.0.s8 %v268
        %v270 = vlaneseq
        %v271 = vshrl.u32 %v270, 7
        %v272 = vsub.s32 %v269, %v271
        %v273 = vrot.slane %v266, %v272
        %v275 = vmax.f32 %v256, %v273
        %v276 = vlaneseq
        %vm277 = vcmp.ge.s32.totalorder %v276, 0
        %vm278 = vcmp.lt.s32.totalorder %v276, 256
        %vm279 = vmand %vm277, %vm278
        %280 = vst.msk [vmem:[#allocation2] sm:$0x3] %vm279, %v275
        // Predicated region
        $region49: #{tpu_custom_call.1} parent=31 // pred_check
          %p281 = pneg %p228
        $region50: #{tpu_custom_call.1} parent=31 // pred_check_branch
          %283 = sbr.rel (%p281) target = $region52
        $region51: #{tpu_custom_call.1} parent=31 // pred_region
          %vm284 = vcmp.lt.s32.totalorder %v276, 512
          %vm285 = vmand %vm277, %vm284
          %286 = vst.msk [vmem:[#allocation3] sm:$0xf] %vm285, 0.0
          %v287 = vld [vmem:[#allocation2] sm:$0x3]
          %288 = vst.msk [vmem:[#allocation3 + $0x1] sm:$0x3] %vm279, %v287
          %v289 = vld [vmem:[#allocation3] sm:$0x7]
          %s290 = sld [smem:[#allocation4]]
          %v291 = vld [vmem:[#allocation9] ss:$4 sm:$0x3]
          %v292 = vstv %s290
          %v293 = vmul.f32 %v292, %v291
          %295 = vrot.lane.b32.xlu0 %v289, 17
          %v296 = vpop.permute.xlu0 %295
          %v297 = vrot.slane %v296, 1
          %vm298 = vcmask 138240
          %v299 = vsel %vm298, %v296, %v297
          %v301 = vmul.f32 %v293, %v299
          %v302 = vadd.f32 %v301, 0.0
          %s303 = sld [smem:[#allocation4 + $0x1]]
          %s304 = scalar_lea.vmem [#allocation9], 1
          %v305 = vld [vmem:[%s304] ss:$4 sm:$0x3]
          %v306 = vstv %s303
          %v307 = vmul.f32 %v306, %v305
          %308 = vrot.lane.b32.xlu0 %v289, 16
          %v309 = vpop.permute.xlu0 %308
          %v310 = vrot.slane %v309, 1
          %vm311 = vcmask 130048
          %v312 = vsel %vm311, %v309, %v310
          %v314 = vmul.f32 %v307, %v312
          %v315 = vadd.f32 %v302, %v314
          %s316 = sld [smem:[#allocation4 + $0x2]]
          %s317 = scalar_lea.vmem [#allocation9], 2
          %v318 = vld [vmem:[%s317] ss:$4 sm:$0x3]
          %v319 = vstv %s316
          %v320 = vmul.f32 %v319, %v318
          %321 = vrot.lane.b32.xlu0 %v289, 15
          %v322 = vpop.permute.xlu0 %321
          %v323 = vrot.slane %v322, 1
          %vm324 = vcmask 121856
          %v325 = vsel %vm324, %v322, %v323
          %v327 = vmul.f32 %v320, %v325
          %v328 = vadd.f32 %v315, %v327
          %s329 = sld [smem:[#allocation4 + $0x80]]
          %v330 = vstv %s329
          %v331 = vmul.f32 %v330, %v291
          %332 = vrot.lane.b32.xlu0 %v289, 1
          %v333 = vpop.permute.xlu0 %332
          %v334 = vrot.slane %v333, 1
          %vm335 = vcmask 7168
          %v336 = vsel %vm335, %v333, %v334
          %v338 = vmul.f32 %v331, %v336
          %v339 = vadd.f32 %v328, %v338
          %v340 = vld [vmem:[#allocation3 + $0x1] sm:$0x3]
          %s341 = sld [smem:[#allocation4 + $0x81]]
          %v342 = vstv %s341
          %v343 = vmul.f32 %v342, %v305
          %v344 = vmul.f32 %v343, %v340
          %v345 = vadd.f32 %v339, %v344
          %v346 = vld [vmem:[#allocation3 + $0x1] sm:$0x7]
          %s347 = sld [smem:[#allocation4 + $0x82]]
          %v348 = vstv %s347
          %v349 = vmul.f32 %v348, %v318
          %351 = vrot.lane.b32.xlu0 %v346, 127
          %v352 = vpop.permute.xlu0 %351
          %v353 = vrot.slane %v352, 1
          %vm354 = vcmask 1039360
          %v355 = vsel %vm354, %v352, %v353
          %v357 = vmul.f32 %v349, %v355
          %v358 = vadd.f32 %v345, %v357
          %s359 = sld [smem:[#allocation4 + $0x100]]
          %v360 = vstv %s359
          %v361 = vmul.f32 %v360, %v291
          %362 = vrot.lane.b32.xlu0 %v346, 113
          %v363 = vpop.permute.xlu0 %362
          %v364 = vrot.slane %v363, 1
          %vm365 = vcmask 924672
          %v366 = vsel %vm365, %v363, %v364
          %v368 = vmul.f32 %v361, %v366
          %v369 = vadd.f32 %v358, %v368
          %s370 = sld [smem:[#allocation4 + $0x101]]
          %v371 = vstv %s370
          %v372 = vmul.f32 %v371, %v305
          %373 = vrot.lane.b32.xlu0 %v346, 112
          %v374 = vpop.permute.xlu0 %373
          %v375 = vrot.slane %v374, 1
          %vm376 = vcmask 916480
          %v377 = vsel %vm376, %v374, %v375
          %v379 = vmul.f32 %v372, %v377
          %v380 = vadd.f32 %v369, %v379
          %s381 = sld [smem:[#allocation4 + $0x102]]
          %v382 = vstv %s381
          %v383 = vmul.f32 %v382, %v318
          %384 = vrot.lane.b32.xlu0 %v346, 111
          %v385 = vpop.permute.xlu0 %384
          %v386 = vrot.slane %v385, 1
          %vm387 = vcmask 908288
          %v388 = vsel %vm387, %v385, %v386
          %v390 = vmul.f32 %v383, %v388
          %v391 = vadd.f32 %v380, %v390
          %v392 = vsub.f32 0.0, %v391
          %v393 = vmul.f32 %v392, 1.442695
          %v394 = vpow.pop %v393
          %v395 = vadd.f32 %v394, 1.0
          %v396 = vrcp.pop %v395
          %v397 = vmul.f32 1.0, %v396
          %398 = vst.msk [vmem:[%s227] sm:$0x3] %vm279, %v397
        $region52: #{tpu_custom_call.1} parent=31 // pred_fallthru
          _
        %s399 = sand.u32 %s112, 1
        %s400 = scalar_lea.sflag [#allocation6], %s399
        %s401 = sand.u32 %s112, 1
        %s402 = smul.addr %s401, 2
        %s403 = scalar_lea.vmem [#allocation11], %s402
        // Predicated region
        $region53: #{tpu_custom_call.1} parent=31 // pred_check
          %p404 = pneg %p122
        $region54: #{tpu_custom_call.1} parent=31 // pred_check_branch
          %406 = sbr.rel (%p404) target = $region56
        $region55: #{tpu_custom_call.1} parent=31 // pred_region
          %s408 = ssub.s32 32, 32
          %409 = vsyncadd %s400, %s408
          %s410 = smul.addr %s26, 2
          %s411 = smul.addr %s410, 16
          %s412 = scalar_lea.hbm %s3, %s411
          %s414 = sshll.u32 %s403, 4
          %s415 = int_to_ptr.vmem [resolvable:$true] %s414
          %417 = dma.vmem_to_hbm [thread:$0]  %s415, 32, %s412, %s400
        $region56: #{tpu_custom_call.1} parent=31 // pred_fallthru
          _
      $region32: #{tpu_custom_call.1} parent=5 // pred_fallthru
        _
      %p418 = scmp.le.s32.totalorder 2, %s17
      // Predicated region
      $region57: #{tpu_custom_call.1} parent=5 // pred_check
        %p419 = pneg %p418
      $region58: #{tpu_custom_call.1} parent=5 // pred_check_branch
        %421 = sbr.rel (%p419) target = $region60
      $region59: #{tpu_custom_call.1} parent=5 // pred_region
        %s422 = ssub.s32 %s17, 2
        // Predicated region
        $region61: #{tpu_custom_call.1} parent=59 // pred_check
          %p423 = pneg %p128
        $region62: #{tpu_custom_call.1} parent=59 // pred_check_branch
          %425 = sbr.rel (%p423) target = $region64
        $region63: #{tpu_custom_call.1} parent=59 // pred_region
          %s426 = sand.u32 %s113, 1
          %s427 = scalar_lea.sflag [#allocation6], %s426
          %s428 = sand.u32 %s113, 1
          %s429 = smul.addr %s428, 2
          %s430 = scalar_lea.vmem [#allocation11], %s429
          %431 = dma.done %s427, 32
        $region64: #{tpu_custom_call.1} parent=59 // pred_fallthru
          _
      $region60: #{tpu_custom_call.1} parent=5 // pred_fallthru
        _
    $region6: #{tpu_custom_call.1} parent=1 // loop_footer
      %s21 = sadd.s32 1, %s17
    $region7: #{tpu_custom_call.1} parent=1 // loop_footer_branch
      %16 = sbr.rel target = $region3
    $region8: #{tpu_custom_call.1} parent=1 // loop_exit
      _
    %432 = vsyncpa [#allocation5], 1
    %s433 = scalar_lea.sflag [#allocation5], 1
    %434 = vsyncpa %s433, 1
    %435 = vsyncpa [#allocation10], 1
    %436 = vsyncpa [#allocation6], 1
    %s437 = scalar_lea.sflag [#allocation6], 1
    %438 = vsyncpa %s437, 1
    %439 = vsyncpa [#allocation7], 1
    %s440 = scalar_lea.sflag [#allocation7], 1
    %441 = vsyncpa %s440, 1

</llo_original>
